<compile_context>
chip_gen: v5e
topology: v5e:2x2
jax: 0.10.0
libtpu: 0.0.40
codegen_flags: <defaults>
</compile_context>

<pallas_src>
import jax
import jax.numpy as jnp
from jax.experimental import pallas as pl
from jax.experimental.pallas import tpu as pltpu


def _copy_kernel(x_ref, o_ref):
    # Pure same-shape tile copy (vld/vst stream); edge blocks are masked by
    # the Pallas runtime.
    o_ref[...] = x_ref[...]


def _round_up(x: int, m: int) -> int:
    return ((x + m - 1) // m) * m


def _pick_tiles(R: int, T: int, dtype, target_bytes: int):
    """Byte-targeted (sublane-pack, 128)-aligned tile for a 2-D (R, T) copy."""
    itemsize = jnp.dtype(dtype).itemsize
    sub = 8 * max(1, 4 // itemsize)   # f32 -> 8, bf16 -> 16, int8/fp8 -> 32
    lane = 128

    # Lane (last-dim) tile: cover T (rounded to 128), capped so one sublane
    # pack of lanes stays within the byte budget.
    max_t = max(lane, (target_bytes // (sub * itemsize)) // lane * lane)
    t_tile = min(_round_up(T, lane), max_t)

    # Sublane tile: fill the remaining byte budget, multiple of the pack.
    max_r = max(sub, (target_bytes // (t_tile * itemsize)) // sub * sub)
    r_tile = min(_round_up(R, sub), max_r)
    return r_tile, t_tile


def reshape_module(x, dim: int = 2):
    """Recommended path: metadata-only unsqueeze (zero HBM traffic)."""
    return jnp.expand_dims(x, axis=dim)


def reshape_module_pallas(x, dim: int = 2, *, target_bytes: int = 2 << 20):
    """Materializing Pallas equivalent of ReshapeModule(dim=2) on (B, C, T)."""
    assert dim == 2, "this kernel materializes the default dim=2 unsqueeze"
    assert x.ndim == 3, "expected (B, C, T) input"
    B, C, T = x.shape
    R = B * C
    if R == 0 or T == 0:
        return jnp.expand_dims(x, axis=2)

    # Free wrapper-side reshape: fold (B, C) into the sublane dim.
    x2 = x.reshape(R, T)

    r_tile, t_tile = _pick_tiles(R, T, x.dtype, target_bytes)
    grid = (pl.cdiv(R, r_tile), pl.cdiv(T, t_tile))
    itemsize = jnp.dtype(x.dtype).itemsize

    y2 = pl.pallas_call(
        _copy_kernel,
        out_shape=jax.ShapeDtypeStruct((R, T), x.dtype),
        grid=grid,
        in_specs=[pl.BlockSpec((r_tile, t_tile), lambda ri, ti: (ri, ti))],
        out_specs=pl.BlockSpec((r_tile, t_tile), lambda ri, ti: (ri, ti)),
        compiler_params=pltpu.CompilerParams(
            dimension_semantics=("parallel", "parallel"),
        ),
        cost_estimate=pl.CostEstimate(
            flops=0,
            transcendentals=0,
            bytes_accessed=2 * x.size * itemsize,
        ),
    )(x2)

    # Free wrapper-side reshape back: (B*C, T) -> (B, C, 1, T).
    return y2.reshape(B, C, 1, T)


if __name__ == "__main__":
    key = jax.random.PRNGKey(0)

    # 1) Small shape consistent with the module's (B, C, T) usage.
    # 2) Ragged shape + tiny byte budget to exercise masked edge blocks on
    #    both grid axes (T=300 -> 128-tiles with a partial edge).
    # 3) bf16 to exercise the packed-sublane (16, 128) tile path.
    cases = [
        ((2, 4, 16), jnp.float32, 2 << 20),
        ((2, 24, 300), jnp.float32, 4096),
        ((2, 4, 16), jnp.bfloat16, 2 << 20),
    ]
    for shape, dtype, tb in cases:
        x = jax.random.normal(key, shape, dtype=jnp.float32).astype(dtype)

        y = jax.block_until_ready(
            reshape_module_pallas(x, dim=2, target_bytes=tb))
        y_ref = jnp.expand_dims(x, axis=2)

        assert y.shape == y_ref.shape, (y.shape, y_ref.shape)
        assert y.dtype == x.dtype, (y.dtype, x.dtype)
        assert jnp.array_equal(y, y_ref), f"mismatch vs reference for {shape} {dtype}"

        # Zero-cost path sanity check as well.
        assert jnp.array_equal(reshape_module(x, dim=2), y_ref)

    print("KERNEL_OK")
</pallas_src>

<mosaic_0001>
module attributes {stable_mosaic.version = 11 : i64} {
  func.func @_copy_kernel(%arg0: i32, %arg1: i32, %arg2: memref<8x128xf32, #tpu.memory_space<vmem>>, %arg3: memref<8x128xf32, #tpu.memory_space<vmem>>) attributes {dimension_semantics = [#tpu.dimension_semantics<parallel>, #tpu.dimension_semantics<parallel>], iteration_bounds = array<i64: 1, 1>, scalar_prefetch = 0 : i64, scratch_operands = 0 : i64, tpu.core_type = #tpu.core_type<tc>, window_params = [{transform_indices = @transform_0, window_bounds = array<i64: 8, 128>}, {transform_indices = @transform_1, window_bounds = array<i64: 8, 128>}]} {
    %c0 = arith.constant 0 : index
    %c0_0 = arith.constant 0 : index
    %0 = vector.load %arg2[%c0, %c0_0] : memref<8x128xf32, #tpu.memory_space<vmem>>, vector<8x128xf32>
    %c0_1 = arith.constant 0 : index
    %c0_2 = arith.constant 0 : index
    %1 = vector.load %arg3[%c0_1, %c0_2] : memref<8x128xf32, #tpu.memory_space<vmem>>, vector<8x128xf32>
    tpu.vector_store %arg3[%c0_1, %c0_2], %0 {strides = array<i32>} : memref<8x128xf32, #tpu.memory_space<vmem>>, vector<8x128xf32>,
    return
  }
  func.func @transform_0(%arg0: i32, %arg1: i32) -> (i32, i32) {
    %c0_i32 = arith.constant 0 : i32
    return %arg0, %arg1 : i32, i32
  }
  func.func @transform_1(%arg0: i32, %arg1: i32) -> (i32, i32) {
    %c0_i32 = arith.constant 0 : i32
    return %arg0, %arg1 : i32, i32
  }
}

</mosaic_0001>

<llo_original>
// kernel: tpu_custom_call.1
$region0: #{tpu_custom_call.1}
  #allocation0 [shape = 'u32[]', space=smem, size = 0x4, offset = 0x4, fixed_abs, tag = 'smem constant byte address 0x4 - core index']
  #allocation1 [shape = 'u32[72,128]{1,0:T(1,128)}', space=vmem, size = 0x9000, scoped, tag = 'internal scratch']
  %s0 = inlined_call_operand.hbm [shape: f32[8,16], index: 0, kind: input, shape index: {}]
  %s1 = inlined_call_operand.hbm [shape: f32[8,16], index: 1, kind: output, shape index: {}]
  %s2 = sld [smem:[#allocation0]]
  $region18: #{tpu_custom_call.1} parent=0
    _
  %s4 = ssub.s32 1, %s2
  %s5 = scalar_select 0, %s4, %s2
  $region1: #{tpu_custom_call.1} parent=0
    #allocation2 [shape = 'u8[4096]{0}', space=vmem, size = 0x1000, scoped, tag = 'input window, operand 0, single buffered']
    #allocation3 [shape = 's32[1]{0}', space=sflag, size = 0x4, scoped, tag = 'scoped memory for tpu_custom_call.1']
    #allocation4 [shape = 's32[1]{0}', space=sflag, size = 0x4, scoped, tag = 'scoped memory for tpu_custom_call.1']
    #allocation5 [shape = 'u8[4096]{0}', space=vmem, size = 0x1000, scoped, tag = 'output window, operand 0, single buffered']
    %6 = vsyncpa [#allocation3], 0
    %7 = vsyncpa [#allocation4], 0
    // Predicated region
    $region2: #{tpu_custom_call.1} parent=1 // pred_check
      _
    $region3: #{tpu_custom_call.1} parent=1 // pred_check_branch
      %9 = sbr.rel (0) target = $region5
    $region4: #{tpu_custom_call.1} parent=1 // pred_region
      %11 = vsyncadd [#allocation3], 0
      %s13 = sshll.u32 %s0, 4
      %s14 = int_to_ptr.hbm [resolvable:$true] %s13
      %s15 = sshll.u32 [#allocation2], 4
      %s16 = int_to_ptr.vmem [resolvable:$true] %s15
      %18 = dma.hbm_to_vmem [thread:$0]  %s14, 128, %s16, [#allocation3]
    $region5: #{tpu_custom_call.1} parent=1 // pred_fallthru
      _
    // Predicated region
    $region6: #{tpu_custom_call.1} parent=1 // pred_check
      _
    $region7: #{tpu_custom_call.1} parent=1 // pred_check_branch
      %20 = sbr.rel (0) target = $region9
    $region8: #{tpu_custom_call.1} parent=1 // pred_region
      %22 = dma.done [#allocation3], 128
    $region9: #{tpu_custom_call.1} parent=1 // pred_fallthru
      _
    %v23 = vld [vmem:[#allocation2] sm:$0xff]
    %24 = vst [vmem:[#allocation5] sm:$0xff] %v23
    // Predicated region
    $region10: #{tpu_custom_call.1} parent=1 // pred_check
      _
    $region11: #{tpu_custom_call.1} parent=1 // pred_check_branch
      %26 = sbr.rel (0) target = $region13
    $region12: #{tpu_custom_call.1} parent=1 // pred_region
      %28 = vsyncadd [#allocation4], 0
      %s30 = sshll.u32 [#allocation5], 4
      %s31 = int_to_ptr.vmem [resolvable:$true] %s30
      %s32 = sshll.u32 %s1, 4
      %s33 = int_to_ptr.hbm [resolvable:$true] %s32
      %35 = dma.vmem_to_hbm [thread:$0]  %s31, 128, %s33, [#allocation4]
    $region13: #{tpu_custom_call.1} parent=1 // pred_fallthru
      _
    // Predicated region
    $region14: #{tpu_custom_call.1} parent=1 // pred_check
      _
    $region15: #{tpu_custom_call.1} parent=1 // pred_check_branch
      %37 = sbr.rel (0) target = $region17
    $region16: #{tpu_custom_call.1} parent=1 // pred_region
      %39 = dma.done [#allocation4], 128
    $region17: #{tpu_custom_call.1} parent=1 // pred_fallthru
      _
    %40 = vsyncpa [#allocation3], 1
    %41 = vsyncpa [#allocation4], 1

</llo_original>
